<compile_context>
chip_gen: v7x
topology: tpu7x:2x2x1
jax: 0.10.0
libtpu: 0.0.40
codegen_flags: <defaults>
</compile_context>

<pallas_src>
import functools

import jax
import jax.numpy as jnp
from jax import lax
from jax.experimental import pallas as pl
from jax.experimental.pallas import tpu as pltpu

# Scoped-VMEM budget: used both to size tiles and as vmem_limit_bytes on every call.
# 48 MiB is above the 16/32 MiB scoped defaults on v5e/v6e (so the cap is no longer the
# binding constraint) while leaving headroom inside v7x's 64 MiB physical VMEM.
VMEM_BUDGET = 48 * 1024 * 1024
STREAM_BLOCK_BYTES = 2 * 1024 * 1024   # target bytes per streamed (double-buffered) block
BT_TARGET = 128                        # batch-row tile target (MXU M dimension)


def _round_up(x, m):
    return (x + m - 1) // m * m


def _pad_to(x, shape):
    return jnp.pad(x, [(0, t - s) for s, t in zip(x.shape, shape)])


def _pick_tile(total, align, cap):
    """Largest multiple of `align` dividing `total` and <= cap; falls back to `total`."""
    best = None
    t = align
    cap = min(cap, total)
    while t <= cap:
        if total % t == 0:
            best = t
        t += align
    return best if best is not None else total


# ----------------------------- image encoder kernel --------------------------
def img_encoder_kernel(patches_ref, wi1_ref, bi1_ref, wi2_ref, bi2_ref,
                       o_ref, acc_ref, *, inv_p):
    p = pl.program_id(1)

    @pl.when(p == 0)
    def _():
        acc_ref[...] = jnp.zeros_like(acc_ref)

    bt, tp, dp = patches_ref.shape
    x = patches_ref[...].reshape(bt * tp, dp)                       # bf16 [BT*TP, Dp]
    h = jnp.dot(x, wi1_ref[...], preferred_element_type=jnp.float32)
    h = jnp.maximum(h + bi1_ref[...], 0.0)                          # [BT*TP, Hip] f32
    # per-image partial sum over this patch tile -> running pooled sum
    acc_ref[...] += h.reshape(bt, tp, -1).sum(axis=1)               # [BT, Hip]

    @pl.when(p == pl.num_programs(1) - 1)
    def _():
        pooled = (acc_ref[...] * inv_p).astype(jnp.bfloat16)        # mean pool
        emb = jnp.dot(pooled, wi2_ref[...],
                      preferred_element_type=jnp.float32) + bi2_ref[...]
        o_ref[...] = emb.astype(o_ref.dtype)


# ------------------------------ text encoder kernel ---------------------------
def txt_encoder_kernel(counts_ref, tok_ref, wt_ref, bt_ref, o_ref, acc_ref, *, inv_s):
    v = pl.program_id(1)

    @pl.when(v == 0)
    def _():
        acc_ref[...] = jnp.zeros_like(acc_ref)

    # counts[b, vocab_tile] @ tok_table[vocab_tile, Ht] == sum of token embeddings
    acc_ref[...] += jnp.dot(counts_ref[...], tok_ref[...],
                            preferred_element_type=jnp.float32)     # [BT, Htp]

    @pl.when(v == pl.num_programs(1) - 1)
    def _():
        pooled = (acc_ref[...] * inv_s).astype(jnp.bfloat16)        # mean pool
        emb = jnp.dot(pooled, wt_ref[...],
                      preferred_element_type=jnp.float32) + bt_ref[...]
        o_ref[...] = emb.astype(o_ref.dtype)


# ------------------------------ similarity kernel -----------------------------
def sim_kernel(img_ref, txt_ref, o_ref):
    a = img_ref[...].astype(jnp.bfloat16)       # single bf16 rounding (emb stored f32)
    b = txt_ref[...].astype(jnp.bfloat16)
    o_ref[...] = lax.dot_general(a, b, (((1,), (1,)), ((), ())),
                                 preferred_element_type=jnp.float32)


# ---------------------------------- wrapper -----------------------------------
@functools.partial(jax.jit, static_argnames=("patch",))
def clip_forward(img, txt, params, *, patch):
    """img: [B, C, H, W] float32 (NCHW).  txt: [B, S] int32 token ids."""
    B, C, H, W = img.shape
    _, S = txt.shape
    ph = pw = patch
    nP = (H // ph) * (W // pw)
    Dp = C * ph * pw
    Hi = params["wi1"].shape[1]
    VOCAB, Ht = params["tok_table"].shape
    E = params["wi2"].shape[1]

    # padded (lane / sublane aligned) dims; the contracted Dp stays UNPADDED in HBM
    Bp = _round_up(B, 8)
    Hip = _round_up(Hi, 128)
    Htp = _round_up(Ht, 128)
    Ep = _round_up(E, 128)
    Vp = _round_up(VOCAB, 128)

    # ---- tiles sized against the VMEM budget ----
    BT = _pick_tile(Bp, 8, BT_TARGET)                       # batch row tile (MXU M dim)
    tp_cap = max(8, STREAM_BLOCK_BYTES // (BT * Dp * 2))
    TP = _pick_tile(nP, 8, tp_cap)                          # patch reduction tile (~2 MiB block)
    tv_cap = max(128, STREAM_BLOCK_BYTES // (Htp * 2))
    TV = _pick_tile(Vp, 128, tv_cap)                        # vocab reduction tile (lane-dense)
    BTI = _pick_tile(Bp, 8, 256)                            # similarity row tile
    BTJ = _pick_tile(Bp, 128, 512)                          # similarity col tile (lane-dense)

    # ---- glue: patch extraction (NCHW -> [B, P, C*ph*pw], matches Conv2d layout) ----
    x = img.reshape(B, C, H // ph, ph, W // pw, pw)
    x = x.transpose(0, 2, 4, 1, 3, 5)                       # B, nh, nw, C, ph, pw
    patches = x.reshape(B, nP, Dp)
    patches = _pad_to(patches, (Bp, nP, Dp)).astype(jnp.bfloat16)

    # ---- glue: token ids -> per-sequence vocab counts (mean pool == counts/S @ table) ----
    counts = jnp.zeros((Bp, Vp), jnp.float32)
    counts = counts.at[jnp.arange(B)[:, None], txt].add(1.0)
    counts = counts.astype(jnp.bfloat16)                    # small integers: exact in bf16

    # ---- padded / bf16 weights, f32 biases ----
    wi1 = _pad_to(params["wi1"], (Dp, Hip)).astype(jnp.bfloat16)
    bi1 = _pad_to(params["bi1"], (1, Hip)).astype(jnp.float32)
    wi2 = _pad_to(params["wi2"], (Hip, Ep)).astype(jnp.bfloat16)
    bi2 = _pad_to(params["bi2"], (1, Ep)).astype(jnp.float32)
    tok = _pad_to(params["tok_table"], (Vp, Htp)).astype(jnp.bfloat16)
    wt = _pad_to(params["wt"], (Htp, Ep)).astype(jnp.bfloat16)
    bt = _pad_to(params["bt"], (1, Ep)).astype(jnp.float32)

    def resident(shape):
        # constant index_map + single buffering: fetched once, no double-buffer VMEM cost
        return pl.BlockSpec(shape, lambda *_: (0,) * len(shape),
                            pipeline_mode=pl.Buffered(1))

    cparams = pltpu.CompilerParams(
        dimension_semantics=("parallel", "arbitrary"),
        vmem_limit_bytes=VMEM_BUDGET,
    )

    # ---- image encoder: grid (batch tiles [parallel], patch tiles [reduction, last]) ----
    img_emb = pl.pallas_call(
        functools.partial(img_encoder_kernel, inv_p=1.0 / nP),
        out_shape=jax.ShapeDtypeStruct((Bp, Ep), jnp.float32),
        grid_spec=pltpu.PrefetchScalarGridSpec(
            num_scalar_prefetch=0,
            grid=(Bp // BT, nP // TP),
            in_specs=[
                pl.BlockSpec((BT, TP, Dp), lambda b, p: (b, p, 0)),   # streamed patches
                resident((Dp, Hip)),
                resident((1, Hip)),
                resident((Hip, Ep)),
                resident((1, Ep)),
            ],
            out_specs=pl.BlockSpec((BT, Ep), lambda b, p: (b, 0)),
            scratch_shapes=[pltpu.VMEM((BT, Hip), jnp.float32)],
        ),
        compiler_params=cparams,
    )(patches, wi1, bi1, wi2, bi2)

    # ---- text encoder: grid (batch tiles [parallel], vocab tiles [reduction, last]) ----
    txt_emb = pl.pallas_call(
        functools.partial(txt_encoder_kernel, inv_s=1.0 / S),
        out_shape=jax.ShapeDtypeStruct((Bp, Ep), jnp.float32),
        grid_spec=pltpu.PrefetchScalarGridSpec(
            num_scalar_prefetch=0,
            grid=(Bp // BT, Vp // TV),
            in_specs=[
                pl.BlockSpec((BT, TV), lambda b, v: (b, v)),          # streamed counts
                pl.BlockSpec((TV, Htp), lambda b, v: (v, 0)),         # streamed table tile
                resident((Htp, Ep)),
                resident((1, Ep)),
            ],
            out_specs=pl.BlockSpec((BT, Ep), lambda b, v: (b, 0)),
            scratch_shapes=[pltpu.VMEM((BT, Htp), jnp.float32)],
        ),
        compiler_params=cparams,
    )(counts, tok, wt, bt)

    # ---- similarity: own MXU-sized tiles, lane-dense output columns, K=Ep resident ----
    sim = pl.pallas_call(
        sim_kernel,
        out_shape=jax.ShapeDtypeStruct((Bp, Bp), jnp.float32),
        grid_spec=pltpu.PrefetchScalarGridSpec(
            num_scalar_prefetch=0,
            grid=(Bp // BTI, Bp // BTJ),
            in_specs=[
                pl.BlockSpec((BTI, Ep), lambda i, j: (i, 0)),
                pl.BlockSpec((BTJ, Ep), lambda i, j: (j, 0)),
            ],
            out_specs=pl.BlockSpec((BTI, BTJ), lambda i, j: (i, j)),
        ),
        compiler_params=pltpu.CompilerParams(
            dimension_semantics=("parallel", "parallel"),
            vmem_limit_bytes=VMEM_BUDGET,
        ),
        cost_estimate=pl.CostEstimate(
            flops=2 * Bp * Bp * Ep,
            transcendentals=0,
            bytes_accessed=(2 * Bp * Ep + Bp * Bp) * 4,
        ),
    )(img_emb, txt_emb)

    return sim[:B, :B]


# --------------------------- pure-JAX f32 reference ----------------------------
def clip_reference(img, txt, params, patch):
    B, C, H, W = img.shape
    ph = pw = patch
    nP = (H // ph) * (W // pw)
    x = img.reshape(B, C, H // ph, ph, W // pw, pw).transpose(0, 2, 4, 1, 3, 5)
    patches = x.reshape(B, nP, C * ph * pw)
    h = jnp.maximum(patches @ params["wi1"] + params["bi1"], 0.0)   # [B,P,Hi]
    img_emb = h.mean(axis=1) @ params["wi2"] + params["bi2"]        # [B,E]
    toks = jnp.take(params["tok_table"], txt, axis=0)               # [B,S,Ht]
    txt_emb = toks.mean(axis=1) @ params["wt"] + params["bt"]       # [B,E]
    return img_emb @ txt_emb.T


# ------------------------------------ main -------------------------------------
if __name__ == "__main__":
    B, C, H, W = 2, 4, 16, 16
    S, VOCAB = 16, 64
    PATCH = 4
    HI, HT, E = 32, 32, 32
    DP = C * PATCH * PATCH

    key = jax.random.PRNGKey(0)
    ks = jax.random.split(key, 8)

    params = {
        "wi1": 0.05 * jax.random.normal(ks[0], (DP, HI), jnp.float32),
        "bi1": 0.05 * jax.random.normal(ks[1], (1, HI), jnp.float32),
        "wi2": 0.05 * jax.random.normal(ks[2], (HI, E), jnp.float32),
        "bi2": 0.05 * jax.random.normal(ks[3], (1, E), jnp.float32),
        "tok_table": 0.05 * jax.random.normal(ks[4], (VOCAB, HT), jnp.float32),
        "wt": 0.05 * jax.random.normal(ks[5], (HT, E), jnp.float32),
        "bt": 0.05 * jax.random.normal(ks[6], (1, E), jnp.float32),
    }

    img = jax.random.normal(ks[7], (B, C, H, W), jnp.float32)
    txt = jax.random.randint(jax.random.PRNGKey(1), (B, S), 0, VOCAB, jnp.int32)

    out = clip_forward(img, txt, params, patch=PATCH)
    out = jax.block_until_ready(out)

    ref = clip_reference(img, txt, params, PATCH)
    assert out.shape == (B, B), out.shape
    # bf16 MXU inputs (f32 accumulation) vs pure-f32 reference
    assert jnp.allclose(out, ref, atol=2e-2, rtol=2e-2), (out, ref)

    print("KERNEL_OK")
</pallas_src>

<mosaic_0001>
module attributes {stable_mosaic.version = 11 : i64} {
  func.func private @main(%arg0: i32) attributes {dimension_semantics = [#tpu.dimension_semantics<core_parallel>], iteration_bounds = array<i64: 2>, tpu.core_type = #tpu.core_type<sc_scalar_subcore>, window_params = []} {
    return
  }
}

module attributes {stable_mosaic.version = 11 : i64} {
  func.func private @main(%arg0: i32) attributes {dimension_semantics = [#tpu.dimension_semantics<core_parallel>], iteration_bounds = array<i64: 2>, tpu.core_type = #tpu.core_type<sc_scalar_subcore>, window_params = []} {
    return
  }
}

module attributes {stable_mosaic.version = 11 : i64} {
  func.func @img_encoder_kernel(%arg0: i32, %arg1: i32, %arg2: memref<8x16x64xbf16, #tpu.memory_space<vmem>>, %arg3: memref<64x128xbf16, #tpu.memory_space<vmem>>, %arg4: memref<1x128xf32, #tpu.memory_space<vmem>>, %arg5: memref<128x128xbf16, #tpu.memory_space<vmem>>, %arg6: memref<1x128xf32, #tpu.memory_space<vmem>>, %arg7: memref<8x128xf32, #tpu.memory_space<vmem>>, %arg8: memref<8x128xf32, #tpu.memory_space<vmem>>) attributes {dimension_semantics = [#tpu.dimension_semantics<parallel>, #tpu.dimension_semantics<arbitrary>], iteration_bounds = array<i64: 1, 1>, scalar_prefetch = 0 : i64, scratch_operands = 1 : i64, tpu.core_type = #tpu.core_type<tc>, window_params = [{transform_indices = @transform_0, window_bounds = array<i64: 8, 16, 64>}, {pipeline_mode = #tpu.pipeline_mode<synchronous>, transform_indices = @transform_1, window_bounds = array<i64: 64, 128>}, {pipeline_mode = #tpu.pipeline_mode<synchronous>, transform_indices = @transform_2, window_bounds = array<i64: 1, 128>}, {pipeline_mode = #tpu.pipeline_mode<synchronous>, transform_indices = @transform_3, window_bounds = array<i64: 128, 128>}, {pipeline_mode = #tpu.pipeline_mode<synchronous>, transform_indices = @transform_4, window_bounds = array<i64: 1, 128>}, {transform_indices = @transform_5, window_bounds = array<i64: 8, 128>}]} {
    %c0_i32 = arith.constant 0 : i32
    %0 = arith.cmpi eq, %arg1, %c0_i32 : i32
    %1 = arith.extui %0 : i1 to i32
    %c0_i32_0 = arith.constant 0 : i32
    %2 = arith.cmpi ne, %1, %c0_i32_0 : i32
    scf.if %2 {
      %cst_15 = arith.constant 0.000000e+00 : f32
      %20 = vector.broadcast %cst_15 : f32 to vector<8x128xf32>
      %c0_16 = arith.constant 0 : index
      %c0_17 = arith.constant 0 : index
      %21 = vector.load %arg8[%c0_16, %c0_17] : memref<8x128xf32, #tpu.memory_space<vmem>>, vector<8x128xf32>
      tpu.vector_store %arg8[%c0_16, %c0_17], %20 {strides = array<i32>} : memref<8x128xf32, #tpu.memory_space<vmem>>, vector<8x128xf32>,
    } else {
    }
    %c0 = arith.constant 0 : index
    %c0_1 = arith.constant 0 : index
    %c0_2 = arith.constant 0 : index
    %3 = vector.load %arg2[%c0, %c0_1, %c0_2] : memref<8x16x64xbf16, #tpu.memory_space<vmem>>, vector<8x16x64xbf16>
    %4 = vector.shape_cast %3 : vector<8x16x64xbf16> to vector<128x64xbf16>
    %c0_3 = arith.constant 0 : index
    %c0_4 = arith.constant 0 : index
    %5 = vector.load %arg3[%c0_3, %c0_4] : memref<64x128xbf16, #tpu.memory_space<vmem>>, vector<64x128xbf16>
    %cst = arith.constant dense<0.000000e+00> : vector<128x128xf32>
    %6 = tpu.matmul %4, %5, %cst {dimension_numbers = #tpu.dot_dimension_numbers<[1], [0], [0], [1], [0, 0, 1, 1], [], []>} : vector<128x64xbf16>, vector<64x128xbf16>, vector<128x128xf32> -> vector<128x128xf32>
    %c0_5 = arith.constant 0 : index
    %c0_6 = arith.constant 0 : index
    %7 = vector.load %arg4[%c0_5, %c0_6] : memref<1x128xf32, #tpu.memory_space<vmem>>, vector<1x128xf32>
    %8 = vector.broadcast %7 : vector<1x128xf32> to vector<128x128xf32>
    %9 = arith.addf %6, %8 : vector<128x128xf32>
    %cst_7 = arith.constant 0.000000e+00 : f32
    %10 = vector.broadcast %cst_7 : f32 to vector<128x128xf32>
    %11 = arith.maximumf %9, %10 : vector<128x128xf32>
    %c0_8 = arith.constant 0 : index
    %c0_9 = arith.constant 0 : index
    %12 = vector.load %arg8[%c0_8, %c0_9] : memref<8x128xf32, #tpu.memory_space<vmem>>, vector<8x128xf32>
    %13 = vector.shape_cast %11 : vector<128x128xf32> to vector<8x16x128xf32>
    %cst_10 = arith.constant dense<0.000000e+00> : vector<8x128xf32>
    %14 = vector.multi_reduction <add>, %13, %cst_10 [1] : vector<8x16x128xf32> to vector<8x128xf32>
    %15 = arith.addf %12, %14 : vector<8x128xf32>
    %c0_11 = arith.constant 0 : index
    %c0_12 = arith.constant 0 : index
    %16 = vector.load %arg8[%c0_11, %c0_12] : memref<8x128xf32, #tpu.memory_space<vmem>>, vector<8x128xf32>
    tpu.vector_store %arg8[%c0_11, %c0_12], %15 {strides = array<i32>} : memref<8x128xf32, #tpu.memory_space<vmem>>, vector<8x128xf32>,
    %c0_i32_13 = arith.constant 0 : i32
    %17 = arith.cmpi eq, %arg1, %c0_i32_13 : i32
    %18 = arith.extui %17 : i1 to i32
    %c0_i32_14 = arith.constant 0 : i32
    %19 = arith.cmpi ne, %18, %c0_i32_14 : i32
    scf.if %19 {
      %c0_15 = arith.constant 0 : index
      %c0_16 = arith.constant 0 : index
      %20 = vector.load %arg8[%c0_15, %c0_16] : memref<8x128xf32, #tpu.memory_space<vmem>>, vector<8x128xf32>
      %cst_17 = arith.constant 6.250000e-02 : f32
      %21 = vector.broadcast %cst_17 : f32 to vector<8x128xf32>
      %22 = arith.mulf %20, %21 : vector<8x128xf32>
      %23 = arith.truncf %22 : vector<8x128xf32> to vector<8x128xbf16>
      %c0_18 = arith.constant 0 : index
      %c0_19 = arith.constant 0 : index
      %24 = vector.load %arg5[%c0_18, %c0_19] : memref<128x128xbf16, #tpu.memory_space<vmem>>, vector<128x128xbf16>
      %cst_20 = arith.constant dense<0.000000e+00> : vector<8x128xf32>
      %25 = tpu.matmul %23, %24, %cst_20 {dimension_numbers = #tpu.dot_dimension_numbers<[1], [0], [0], [1], [0, 0, 1, 1], [], []>} : vector<8x128xbf16>, vector<128x128xbf16>, vector<8x128xf32> -> vector<8x128xf32>
      %c0_21 = arith.constant 0 : index
      %c0_22 = arith.constant 0 : index
      %26 = vector.load %arg6[%c0_21, %c0_22] : memref<1x128xf32, #tpu.memory_space<vmem>>, vector<1x128xf32>
      %27 = vector.broadcast %26 : vector<1x128xf32> to vector<8x128xf32>
      %28 = arith.addf %25, %27 : vector<8x128xf32>
      %c0_23 = arith.constant 0 : index
      %c0_24 = arith.constant 0 : index
      %29 = vector.load %arg7[%c0_23, %c0_24] : memref<8x128xf32, #tpu.memory_space<vmem>>, vector<8x128xf32>
      tpu.vector_store %arg7[%c0_23, %c0_24], %28 {strides = array<i32>} : memref<8x128xf32, #tpu.memory_space<vmem>>, vector<8x128xf32>,
    } else {
    }
    return
  }
  func.func @transform_0(%arg0: i32, %arg1: i32) -> (i32, i32, i32) {
    %c0_i32 = arith.constant 0 : i32
    %c0_i32_0 = arith.constant 0 : i32
    return %arg0, %arg1, %c0_i32 : i32, i32, i32
  }
  func.func @transform_1(%arg0: i32, %arg1: i32) -> (i32, i32) {
    %c0_i32 = arith.constant 0 : i32
    %c0_i32_0 = arith.constant 0 : i32
    %c0_i32_1 = arith.constant 0 : i32
    return %c0_i32, %c0_i32_0 : i32, i32
  }
  func.func @transform_2(%arg0: i32, %arg1: i32) -> (i32, i32) {
    %c0_i32 = arith.constant 0 : i32
    %c0_i32_0 = arith.constant 0 : i32
    %c0_i32_1 = arith.constant 0 : i32
    return %c0_i32, %c0_i32_0 : i32, i32
  }
  func.func @transform_3(%arg0: i32, %arg1: i32) -> (i32, i32) {
    %c0_i32 = arith.constant 0 : i32
    %c0_i32_0 = arith.constant 0 : i32
    %c0_i32_1 = arith.constant 0 : i32
    return %c0_i32, %c0_i32_0 : i32, i32
  }
  func.func @transform_4(%arg0: i32, %arg1: i32) -> (i32, i32) {
    %c0_i32 = arith.constant 0 : i32
    %c0_i32_0 = arith.constant 0 : i32
    %c0_i32_1 = arith.constant 0 : i32
    return %c0_i32, %c0_i32_0 : i32, i32
  }
  func.func @transform_5(%arg0: i32, %arg1: i32) -> (i32, i32) {
    %c0_i32 = arith.constant 0 : i32
    %c0_i32_0 = arith.constant 0 : i32
    return %arg0, %c0_i32 : i32, i32
  }
}

module attributes {stable_mosaic.version = 11 : i64} {
  func.func @txt_encoder_kernel(%arg0: i32, %arg1: i32, %arg2: memref<8x128xbf16, #tpu.memory_space<vmem>>, %arg3: memref<128x128xbf16, #tpu.memory_space<vmem>>, %arg4: memref<128x128xbf16, #tpu.memory_space<vmem>>, %arg5: memref<1x128xf32, #tpu.memory_space<vmem>>, %arg6: memref<8x128xf32, #tpu.memory_space<vmem>>, %arg7: memref<8x128xf32, #tpu.memory_space<vmem>>) attributes {dimension_semantics = [#tpu.dimension_semantics<parallel>, #tpu.dimension_semantics<arbitrary>], iteration_bounds = array<i64: 1, 1>, scalar_prefetch = 0 : i64, scratch_operands = 1 : i64, tpu.core_type = #tpu.core_type<tc>, window_params = [{transform_indices = @transform_0, window_bounds = array<i64: 8, 128>}, {transform_indices = @transform_1, window_bounds = array<i64: 128, 128>}, {pipeline_mode = #tpu.pipeline_mode<synchronous>, transform_indices = @transform_2, window_bounds = array<i64: 128, 128>}, {pipeline_mode = #tpu.pipeline_mode<synchronous>, transform_indices = @transform_3, window_bounds = array<i64: 1, 128>}, {transform_indices = @transform_4, window_bounds = array<i64: 8, 128>}]} {
    %c0_i32 = arith.constant 0 : i32
    %0 = arith.cmpi eq, %arg1, %c0_i32 : i32
    %1 = arith.extui %0 : i1 to i32
    %c0_i32_0 = arith.constant 0 : i32
    %2 = arith.cmpi ne, %1, %c0_i32_0 : i32
    scf.if %2 {
      %cst_10 = arith.constant 0.000000e+00 : f32
      %12 = vector.broadcast %cst_10 : f32 to vector<8x128xf32>
      %c0_11 = arith.constant 0 : index
      %c0_12 = arith.constant 0 : index
      %13 = vector.load %arg7[%c0_11, %c0_12] : memref<8x128xf32, #tpu.memory_space<vmem>>, vector<8x128xf32>
      tpu.vector_store %arg7[%c0_11, %c0_12], %12 {strides = array<i32>} : memref<8x128xf32, #tpu.memory_space<vmem>>, vector<8x128xf32>,
    } else {
    }
    %c0 = arith.constant 0 : index
    %c0_1 = arith.constant 0 : index
    %3 = vector.load %arg7[%c0, %c0_1] : memref<8x128xf32, #tpu.memory_space<vmem>>, vector<8x128xf32>
    %c0_2 = arith.constant 0 : index
    %c0_3 = arith.constant 0 : index
    %4 = vector.load %arg2[%c0_2, %c0_3] : memref<8x128xbf16, #tpu.memory_space<vmem>>, vector<8x128xbf16>
    %c0_4 = arith.constant 0 : index
    %c0_5 = arith.constant 0 : index
    %5 = vector.load %arg3[%c0_4, %c0_5] : memref<128x128xbf16, #tpu.memory_space<vmem>>, vector<128x128xbf16>
    %cst = arith.constant dense<0.000000e+00> : vector<8x128xf32>
    %6 = tpu.matmul %4, %5, %cst {dimension_numbers = #tpu.dot_dimension_numbers<[1], [0], [0], [1], [0, 0, 1, 1], [], []>} : vector<8x128xbf16>, vector<128x128xbf16>, vector<8x128xf32> -> vector<8x128xf32>
    %7 = arith.addf %3, %6 : vector<8x128xf32>
    %c0_6 = arith.constant 0 : index
    %c0_7 = arith.constant 0 : index
    %8 = vector.load %arg7[%c0_6, %c0_7] : memref<8x128xf32, #tpu.memory_space<vmem>>, vector<8x128xf32>
    tpu.vector_store %arg7[%c0_6, %c0_7], %7 {strides = array<i32>} : memref<8x128xf32, #tpu.memory_space<vmem>>, vector<8x128xf32>,
    %c0_i32_8 = arith.constant 0 : i32
    %9 = arith.cmpi eq, %arg1, %c0_i32_8 : i32
    %10 = arith.extui %9 : i1 to i32
    %c0_i32_9 = arith.constant 0 : i32
    %11 = arith.cmpi ne, %10, %c0_i32_9 : i32
    scf.if %11 {
      %c0_10 = arith.constant 0 : index
      %c0_11 = arith.constant 0 : index
      %12 = vector.load %arg7[%c0_10, %c0_11] : memref<8x128xf32, #tpu.memory_space<vmem>>, vector<8x128xf32>
      %cst_12 = arith.constant 6.250000e-02 : f32
      %13 = vector.broadcast %cst_12 : f32 to vector<8x128xf32>
      %14 = arith.mulf %12, %13 : vector<8x128xf32>
      %15 = arith.truncf %14 : vector<8x128xf32> to vector<8x128xbf16>
      %c0_13 = arith.constant 0 : index
      %c0_14 = arith.constant 0 : index
      %16 = vector.load %arg4[%c0_13, %c0_14] : memref<128x128xbf16, #tpu.memory_space<vmem>>, vector<128x128xbf16>
      %cst_15 = arith.constant dense<0.000000e+00> : vector<8x128xf32>
      %17 = tpu.matmul %15, %16, %cst_15 {dimension_numbers = #tpu.dot_dimension_numbers<[1], [0], [0], [1], [0, 0, 1, 1], [], []>} : vector<8x128xbf16>, vector<128x128xbf16>, vector<8x128xf32> -> vector<8x128xf32>
      %c0_16 = arith.constant 0 : index
      %c0_17 = arith.constant 0 : index
      %18 = vector.load %arg5[%c0_16, %c0_17] : memref<1x128xf32, #tpu.memory_space<vmem>>, vector<1x128xf32>
      %19 = vector.broadcast %18 : vector<1x128xf32> to vector<8x128xf32>
      %20 = arith.addf %17, %19 : vector<8x128xf32>
      %c0_18 = arith.constant 0 : index
      %c0_19 = arith.constant 0 : index
      %21 = vector.load %arg6[%c0_18, %c0_19] : memref<8x128xf32, #tpu.memory_space<vmem>>, vector<8x128xf32>
      tpu.vector_store %arg6[%c0_18, %c0_19], %20 {strides = array<i32>} : memref<8x128xf32, #tpu.memory_space<vmem>>, vector<8x128xf32>,
    } else {
    }
    return
  }
  func.func @transform_0(%arg0: i32, %arg1: i32) -> (i32, i32) {
    %c0_i32 = arith.constant 0 : i32
    return %arg0, %arg1 : i32, i32
  }
  func.func @transform_1(%arg0: i32, %arg1: i32) -> (i32, i32) {
    %c0_i32 = arith.constant 0 : i32
    %c0_i32_0 = arith.constant 0 : i32
    return %arg1, %c0_i32 : i32, i32
  }
  func.func @transform_2(%arg0: i32, %arg1: i32) -> (i32, i32) {
    %c0_i32 = arith.constant 0 : i32
    %c0_i32_0 = arith.constant 0 : i32
    %c0_i32_1 = arith.constant 0 : i32
    return %c0_i32, %c0_i32_0 : i32, i32
  }
  func.func @transform_3(%arg0: i32, %arg1: i32) -> (i32, i32) {
    %c0_i32 = arith.constant 0 : i32
    %c0_i32_0 = arith.constant 0 : i32
    %c0_i32_1 = arith.constant 0 : i32
    return %c0_i32, %c0_i32_0 : i32, i32
  }
  func.func @transform_4(%arg0: i32, %arg1: i32) -> (i32, i32) {
    %c0_i32 = arith.constant 0 : i32
    %c0_i32_0 = arith.constant 0 : i32
    return %arg0, %c0_i32 : i32, i32
  }
}

module attributes {stable_mosaic.version = 11 : i64} {
  func.func @sim_kernel(%arg0: i32, %arg1: i32, %arg2: memref<8x128xf32, #tpu.memory_space<vmem>>, %arg3: memref<8x128xf32, #tpu.memory_space<vmem>>, %arg4: memref<8x8xf32, #tpu.memory_space<vmem>>) attributes {dimension_semantics = [#tpu.dimension_semantics<parallel>, #tpu.dimension_semantics<parallel>], iteration_bounds = array<i64: 1, 1>, scalar_prefetch = 0 : i64, scratch_operands = 0 : i64, tpu.core_type = #tpu.core_type<tc>, window_params = [{transform_indices = @transform_0, window_bounds = array<i64: 8, 128>}, {transform_indices = @transform_1, window_bounds = array<i64: 8, 128>}, {transform_indices = @transform_2, window_bounds = array<i64: 8, 8>}]} {
    %c0 = arith.constant 0 : index
    %c0_0 = arith.constant 0 : index
    %0 = vector.load %arg2[%c0, %c0_0] : memref<8x128xf32, #tpu.memory_space<vmem>>, vector<8x128xf32>
    %1 = arith.truncf %0 : vector<8x128xf32> to vector<8x128xbf16>
    %c0_1 = arith.constant 0 : index
    %c0_2 = arith.constant 0 : index
    %2 = vector.load %arg3[%c0_1, %c0_2] : memref<8x128xf32, #tpu.memory_space<vmem>>, vector<8x128xf32>
    %3 = arith.truncf %2 : vector<8x128xf32> to vector<8x128xbf16>
    %cst = arith.constant dense<0.000000e+00> : vector<8x8xf32>
    %4 = tpu.matmul %1, %3, %cst {dimension_numbers = #tpu.dot_dimension_numbers<[1], [1], [0], [0], [0, 0, 1, 0], [], []>} : vector<8x128xbf16>, vector<8x128xbf16>, vector<8x8xf32> -> vector<8x8xf32>
    %c0_3 = arith.constant 0 : index
    %c0_4 = arith.constant 0 : index
    %5 = vector.load %arg4[%c0_3, %c0_4] : memref<8x8xf32, #tpu.memory_space<vmem>>, vector<8x8xf32>
    tpu.vector_store %arg4[%c0_3, %c0_4], %4 {strides = array<i32>} : memref<8x8xf32, #tpu.memory_space<vmem>>, vector<8x8xf32>,
    return
  }
  func.func @transform_0(%arg0: i32, %arg1: i32) -> (i32, i32) {
    %c0_i32 = arith.constant 0 : i32
    %c0_i32_0 = arith.constant 0 : i32
    return %arg0, %c0_i32 : i32, i32
  }
  func.func @transform_1(%arg0: i32, %arg1: i32) -> (i32, i32) {
    %c0_i32 = arith.constant 0 : i32
    %c0_i32_0 = arith.constant 0 : i32
    return %arg1, %c0_i32 : i32, i32
  }
  func.func @transform_2(%arg0: i32, %arg1: i32) -> (i32, i32) {
    %c0_i32 = arith.constant 0 : i32
    return %arg0, %arg1 : i32, i32
  }
}

</mosaic_0001>

<llo_original>
// kernel: clip_forward.5
$region0: #{clip_forward.5}
  #allocation0 [shape = 'u32[]', space=smem, size = 0x4, offset = 0x4, fixed_abs, tag = 'smem constant byte address 0x4 - core index']
  #allocation1 [shape = 'u32[144,128]{1,0:T(1,128)}', space=vmem, size = 0x12000, scoped, tag = 'internal scratch']
  %s0 = inlined_call_operand.vmem [shape: f32[8,128], index: 0, kind: input, shape index: {}]
  %s1 = inlined_call_operand.vmem [shape: f32[8,128], index: 1, kind: input, shape index: {}]
  %s2 = inlined_call_operand.vmem [shape: f32[8,8], index: 2, kind: output, shape index: {}]
  %s3 = sld [smem:[#allocation0]]
  $region18: #{clip_forward.5} parent=0
    _
  %s5 = ssub.s32 1, %s3
  %s6 = scalar_select 0, %s5, %s3
  // Predicated region
  $region2: #{clip_forward.5} parent=0 // pred_check
    _
  $region3: #{clip_forward.5} parent=0 // pred_check_branch
    %8 = sbr.rel (0) target = $region5
  $region4: #{clip_forward.5} parent=0 // pred_region
    _
  $region5: #{clip_forward.5} parent=0 // pred_fallthru
    _
  // Predicated region
  $region6: #{clip_forward.5} parent=0 // pred_check
    _
  $region7: #{clip_forward.5} parent=0 // pred_check_branch
    %10 = sbr.rel (0) target = $region9
  $region8: #{clip_forward.5} parent=0 // pred_region
    _
  $region9: #{clip_forward.5} parent=0 // pred_fallthru
    _
  %v12 = vld [vmem:[%s0] sm:$0xff]
  %v13 = vpack.c.bf16 %v12, %v12
  %v14 = vld [vmem:[%s1] sm:$0xff]
  %v15 = vpack.c.bf16 %v14, %v14
  %16 = vmatprep.subr.bf16.mxu0 0
  %17 = vmatpush1.bf16.xpose.msra.mxu0 %v15
  %18 = vmatprep.subr.bf16.mxu0 0
  %19 = vmatpush1.bf16.xpose.msra.mxu0 0
  %20 = vmatprep.subr.bf16.mxu0 0
  %21 = vmatpush1.bf16.xpose.msra.mxu0 0
  %22 = vmatprep.subr.bf16.mxu0 0
  %23 = vmatpush1.bf16.xpose.msra.mxu0 0
  %24 = vmatprep.subr.bf16.mxu0 0
  %25 = vmatpush1.bf16.xpose.msra.mxu0 0
  %26 = vmatprep.subr.bf16.mxu0 0
  %27 = vmatpush1.bf16.xpose.msra.mxu0 0
  %28 = vmatprep.subr.bf16.mxu0 0
  %29 = vmatpush1.bf16.xpose.msra.mxu0 0
  %30 = vmatprep.subr.bf16.mxu0 0
  %31 = vmatpush1.bf16.xpose.msra.mxu0 0
  %32 = vmatprep.subr.bf16.mxu0 0
  %33 = vmatpush1.bf16.xpose.msra.mxu0 0
  %34 = vmatprep.subr.bf16.mxu0 0
  %35 = vmatpush1.bf16.xpose.msra.mxu0 0
  %36 = vmatprep.subr.bf16.mxu0 0
  %37 = vmatpush1.bf16.xpose.msra.mxu0 0
  %38 = vmatprep.subr.bf16.mxu0 0
  %39 = vmatpush1.bf16.xpose.msra.mxu0 0
  %40 = vmatprep.subr.bf16.mxu0 0
  %41 = vmatpush1.bf16.xpose.msra.mxu0 0
  %42 = vmatprep.subr.bf16.mxu0 0
  %43 = vmatpush1.bf16.xpose.msra.mxu0 0
  %44 = vmatprep.subr.bf16.mxu0 0
  %45 = vmatpush1.bf16.xpose.msra.mxu0 0
  %46 = vmatprep.subr.bf16.mxu0 0
  %47 = vmatpush1.bf16.xpose.msra.mxu0 0
  %48 = vmatprep.mubr.bf16.mxu0 0
  %49 = vmatmul.mubr.bf16.gmra.mrb[0].mxu0 %v13
  %v50 = vpop.f32.mrb[0].mxu0
  %v51 = vadd.f32 0.0, %v50
  %v52 = vpop.f32.mrb[0].mxu0
  %v53 = vpop.f32.mrb[0].mxu0
  %v54 = vpop.f32.mrb[0].mxu0
  %55 = vdwg.mxu0
  %vm56 = vcmask 64512
  %57 = vst.msk [vmem:[%s2] sm:$0xff] %vm56, %v51
  // Predicated region
  $region10: #{clip_forward.5} parent=0 // pred_check
    _
  $region11: #{clip_forward.5} parent=0 // pred_check_branch
    %59 = sbr.rel (0) target = $region13
  $region12: #{clip_forward.5} parent=0 // pred_region
    _
  $region13: #{clip_forward.5} parent=0 // pred_fallthru
    _
  // Predicated region
  $region14: #{clip_forward.5} parent=0 // pred_check
    _
  $region15: #{clip_forward.5} parent=0 // pred_check_branch
    %61 = sbr.rel (0) target = $region17
  $region16: #{clip_forward.5} parent=0 // pred_region
    _
  $region17: #{clip_forward.5} parent=0 // pred_fallthru
    _

// kernel: clip_forward.4
$region0: #{clip_forward.4}
  #allocation0 [shape = 'u32[]', space=smem, size = 0x4, offset = 0x4, fixed_abs, tag = 'smem constant byte address 0x4 - core index']
  #allocation1 [shape = 'u32[144,128]{1,0:T(1,128)}', space=vmem, size = 0x12000, scoped, tag = 'internal scratch']
  #allocation2 [shape = 'f32[8,128]{1,0:T(8,128)}', space=vmem, size = 0x1000, scoped, tag = 'scratch operand']
  %s0 = inlined_call_operand.vmem [shape: bf16[8,128], index: 0, kind: input, shape index: {}]
  %s1 = inlined_call_operand.vmem [shape: bf16[128,128], index: 1, kind: input, shape index: {}]
  %s2 = inlined_call_operand.vmem [shape: bf16[128,128], index: 2, kind: input, shape index: {}]
  %s3 = inlined_call_operand.vmem [shape: f32[1,128], index: 3, kind: input, shape index: {}]
  %s4 = inlined_call_operand.vmem [shape: f32[8,128], index: 4, kind: output, shape index: {}]
  %s5 = sld [smem:[#allocation0]]
  $region34: #{clip_forward.4} parent=0
    _
  %s7 = ssub.s32 1, %s5
  %s8 = scalar_select 0, %s7, %s5
  // Predicated region
  $region2: #{clip_forward.4} parent=0 // pred_check
    _
  $region3: #{clip_forward.4} parent=0 // pred_check_branch
    %10 = sbr.rel (0) target = $region5
  $region4: #{clip_forward.4} parent=0 // pred_region
    _
  $region5: #{clip_forward.4} parent=0 // pred_fallthru
    _
  // Predicated region
  $region6: #{clip_forward.4} parent=0 // pred_check
    _
  $region7: #{clip_forward.4} parent=0 // pred_check_branch
    %12 = sbr.rel (0) target = $region9
  $region8: #{clip_forward.4} parent=0 // pred_region
    _
  $region9: #{clip_forward.4} parent=0 // pred_fallthru
    _
  // Predicated region
  $region10: #{clip_forward.4} parent=0 // pred_check
    _
  $region11: #{clip_forward.4} parent=0 // pred_check_branch
    %14 = sbr.rel (0) target = $region13
  $region12: #{clip_forward.4} parent=0 // pred_region
    _
  $region13: #{clip_forward.4} parent=0 // pred_fallthru
    _
  // Predicated region
  $region14: #{clip_forward.4} parent=0 // pred_check
    _
  $region15: #{clip_forward.4} parent=0 // pred_check_branch
    %16 = sbr.rel (0) target = $region17
  $region16: #{clip_forward.4} parent=0 // pred_region
    _
  $region17: #{clip_forward.4} parent=0 // pred_fallthru
    _
  %p18 = scmp.eq.s32.totalorder 0, 0
  // Predicated region
  $region18: #{clip_forward.4} parent=0 // pred_check
    %p19 = pneg %p18
  $region19: #{clip_forward.4} parent=0 // pred_check_branch
    %21 = sbr.rel (%p19) target = $region21
  $region20: #{clip_forward.4} parent=0 // pred_region
    %22 = vst [vmem:[#allocation2] sm:$0xff] 0.0
  $region21: #{clip_forward.4} parent=0 // pred_fallthru
    _
  %v23 = vld [vmem:[#allocation2] sm:$0xff]
  %v24 = vld [vmem:[%s0] sm:$0xf]
  %v25 = vld [vmem:[%s1] sm:$0xf]
  %v26 = vld [vmem:[%s1 + $0x4] sm:$0xf]
  %v27 = vld [vmem:[%s1 + $0x8] sm:$0xf]
  %v28 = vld [vmem:[%s1 + $0xc] sm:$0xf]
  %v29 = vld [vmem:[%s1 + $0x10] sm:$0xf]
  %v30 = vld [vmem:[%s1 + $0x14] sm:$0xf]
  %v31 = vld [vmem:[%s1 + $0x18] sm:$0xf]
  %v32 = vld [vmem:[%s1 + $0x1c] sm:$0xf]
  %v33 = vld [vmem:[%s1 + $0x20] sm:$0xf]
  %v34 = vld [vmem:[%s1 + $0x24] sm:$0xf]
  %v35 = vld [vmem:[%s1 + $0x28] sm:$0xf]
  %v36 = vld [vmem:[%s1 + $0x2c] sm:$0xf]
  %v37 = vld [vmem:[%s1 + $0x30] sm:$0xf]
  %v38 = vld [vmem:[%s1 + $0x34] sm:$0xf]
  %v39 = vld [vmem:[%s1 + $0x38] sm:$0xf]
  %v40 = vld [vmem:[%s1 + $0x3c] sm:$0xf]
  %v57 = vunpack.c.l.b16 %v25
  %v58 = vunpack.c.l.b16 %v26
  %v59 = vunpack.c.l.b16 %v27
  %v60 = vunpack.c.l.b16 %v28
  %v61 = vunpack.c.l.b16 %v29
  %v62 = vunpack.c.l.b16 %v30
  %v63 = vunpack.c.l.b16 %v31
  %v64 = vunpack.c.l.b16 %v32
  %v65 = vunpack.c.l.b16 %v33
  %v66 = vunpack.c.l.b16 %v34
  %v67 = vunpack.c.l.b16 %v35
  %v68 = vunpack.c.l.b16 %v36
  %v69 = vunpack.c.l.b16 %v37
  %v70 = vunpack.c.l.b16 %v38
  %v71 = vunpack.c.l.b16 %v39
  %v72 = vunpack.c.l.b16 %v40
  %v73 = vpack.c.b16 %v58, %v57
  %v74 = vpack.c.b16 %v60, %v59
  %v75 = vpack.c.b16 %v62, %v61
  %v76 = vpack.c.b16 %v64, %v63
  %v77 = vpack.c.b16 %v66, %v65
  %v78 = vpack.c.b16 %v68, %v67
  %v79 = vpack.c.b16 %v70, %v69
  %v80 = vpack.c.b16 %v72, %v71
  %89 = vmatprep.subr.bf16.mxu0 0
  %90 = vmatpush1.bf16.msra.mxu0 %v73
  %91 = vmatprep.subr.bf16.mxu0 0
  %92 = vmatpush1.bf16.msra.mxu0 %v74
  %93 = vmatprep.subr.bf16.mxu0 0
  %94 = vmatpush1.bf16.msra.mxu0 %v75
  %95 = vmatprep.subr.bf16.mxu0 0
  %96 = vmatpush1.bf16.msra.mxu0 %v76
  %97 = vmatprep.subr.bf16.mxu0 0
  %98 = vmatpush1.bf16.msra.mxu0 %v77
  %99 = vmatprep.subr.bf16.mxu0 0
  %100 = vmatpush1.bf16.msra.mxu0 %v78
  %101 = vmatprep.subr.bf16.mxu0 0
  %102 = vmatpush1.bf16.msra.mxu0 %v79
  %103 = vmatprep.subr.bf16.mxu0 0
  %104 = vmatpush1.bf16.msra.mxu0 %v80
  %105 = vmatprep.subr.bf16.mxu0 0
  %106 = vmatpush1.bf16.msra.mxu0 0
  %107 = vmatprep.subr.bf16.mxu0 0
  %108 = vmatpush1.bf16.msra.mxu0 0
  %109 = vmatprep.subr.bf16.mxu0 0
  %110 = vmatpush1.bf16.msra.mxu0 0
  %111 = vmatprep.subr.bf16.mxu0 0
  %112 = vmatpush1.bf16.msra.mxu0 0
  %113 = vmatprep.subr.bf16.mxu0 0
  %114 = vmatpush1.bf16.msra.mxu0 0
  %115 = vmatprep.subr.bf16.mxu0 0
  %116 = vmatpush1.bf16.msra.mxu0 0
  %117 = vmatprep.subr.bf16.mxu0 0
  %118 = vmatpush1.bf16.msra.mxu0 0
  %119 = vmatprep.subr.bf16.mxu0 0
  %120 = vmatpush1.bf16.msra.mxu0 0
  %121 = vmatprep.mubr.bf16.mxu0 0
  %122 = vmatmul.mubr.bf16.gmra.mrb[0].mxu0 %v24
  %v123 = vpop.f32.mrb[0].mxu0
  %v124 = vadd.f32 0.0, %v123
  %v125 = vpop.f32.mrb[0].mxu0
  %v126 = vpop.f32.mrb[0].mxu0
  %v127 = vpop.f32.mrb[0].mxu0
  %128 = vdwg.mxu0
  %v129 = vadd.f32 %v23, %v124
  %130 = vst [vmem:[#allocation2] sm:$0xff] %v129
  // Predicated region
  $region22: #{clip_forward.4} parent=0 // pred_check
    %p131 = pneg %p18
  $region23: #{clip_forward.4} parent=0 // pred_check_branch
    %133 = sbr.rel (%p131) target = $region25
  $region24: #{clip_forward.4} parent=0 // pred_region
    %v134 = vld [vmem:[#allocation2] sm:$0xff]
    %v135 = vmul.f32 %v134, 0.0625
    %v136 = vpack.c.bf16 %v135, %v135
    %v137 = vld [vmem:[%s2] sm:$0xf]
    %v138 = vld [vmem:[%s2 + $0x4] sm:$0xf]
    %v139 = vld [vmem:[%s2 + $0x8] sm:$0xf]
    %v140 = vld [vmem:[%s2 + $0xc] sm:$0xf]
    %v141 = vld [vmem:[%s2 + $0x10] sm:$0xf]
    %v142 = vld [vmem:[%s2 + $0x14] sm:$0xf]
    %v143 = vld [vmem:[%s2 + $0x18] sm:$0xf]
    %v144 = vld [vmem:[%s2 + $0x1c] sm:$0xf]
    %v145 = vld [vmem:[%s2 + $0x20] sm:$0xf]
    %v146 = vld [vmem:[%s2 + $0x24] sm:$0xf]
    %v147 = vld [vmem:[%s2 + $0x28] sm:$0xf]
    %v148 = vld [vmem:[%s2 + $0x2c] sm:$0xf]
    %v149 = vld [vmem:[%s2 + $0x30] sm:$0xf]
    %v150 = vld [vmem:[%s2 + $0x34] sm:$0xf]
    %v151 = vld [vmem:[%s2 + $0x38] sm:$0xf]
    %v152 = vld [vmem:[%s2 + $0x3c] sm:$0xf]
    %v153 = vld [vmem:[%s3] sm:$0x1]
    %v155 = vlaneseq
    %v156 = vshrl.u32 %v155, 7
    %v157 = vsub.s32 0, %v156
    %v158 = vrot.slane %v153, %v157
    %v176 = vunpack.c.l.b16 %v137
    %v177 = vunpack.c.l.b16 %v138
    %v178 = vunpack.c.l.b16 %v139
    %v179 = vunpack.c.l.b16 %v140
    %v180 = vunpack.c.l.b16 %v141
    %v181 = vunpack.c.l.b16 %v142
    %v182 = vunpack.c.l.b16 %v143
    %v183 = vunpack.c.l.b16 %v144
    %v184 = vunpack.c.l.b16 %v145
    %v185 = vunpack.c.l.b16 %v146
    %v186 = vunpack.c.l.b16 %v147
    %v187 = vunpack.c.l.b16 %v148
    %v188 = vunpack.c.l.b16 %v149
    %v189 = vunpack.c.l.b16 %v150
    %v190 = vunpack.c.l.b16 %v151
    %v191 = vunpack.c.l.b16 %v152
    %v192 = vpack.c.b16 %v177, %v176
    %v193 = vpack.c.b16 %v179, %v178
    %v194 = vpack.c.b16 %v181, %v180
    %v195 = vpack.c.b16 %v183, %v182
    %v196 = vpack.c.b16 %v185, %v184
    %v197 = vpack.c.b16 %v187, %v186
    %v198 = vpack.c.b16 %v189, %v188
    %v199 = vpack.c.b16 %v191, %v190
    %208 = vmatprep.subr.bf16.mxu0 0
    %209 = vmatpush1.bf16.msra.mxu0 %v192
    %210 = vmatprep.subr.bf16.mxu0 0
    %211 = vmatpush1.bf16.msra.mxu0 %v193
    %212 = vmatprep.subr.bf16.mxu0 0
    %213 = vmatpush1.bf16.msra.mxu0 %v194
    %214 = vmatprep.subr.bf16.mxu0 0
    %215 = vmatpush1.bf16.msra.mxu0 %v195
    %216 = vmatprep.subr.bf16.mxu0 0
    %217 = vmatpush1.bf16.msra.mxu0 %v196
    %218 = vmatprep.subr.bf16.mxu0 0
    %219 = vmatpush1.bf16.msra.mxu0 %v197
    %220 = vmatprep.subr.bf16.mxu0 0
    %221 = vmatpush1.bf16.msra.mxu0 %v198
    %222 = vmatprep.subr.bf16.mxu0 0
    %223 = vmatpush1.bf16.msra.mxu0 %v199
    %224 = vmatprep.subr.bf16.mxu0 0
    %225 = vmatpush1.bf16.msra.mxu0 0
    %226 = vmatprep.subr.bf16.mxu0 0
    %227 = vmatpush1.bf16.msra.mxu0 0
    %228 = vmatprep.subr.bf16.mxu0 0
    %229 = vmatpush1.bf16.msra.mxu0 0
    %230 = vmatprep.subr.bf16.mxu0 0
    %231 = vmatpush1.bf16.msra.mxu0 0
    %232 = vmatprep.subr.bf16.mxu0 0
    %233 = vmatpush1.bf16.msra.mxu0 0
    %234 = vmatprep.subr.bf16.mxu0 0
    %235 = vmatpush1.bf16.msra.mxu0 0
    %236 = vmatprep.subr.bf16.mxu0 0
    %237 = vmatpush1.bf16.msra.mxu0 0
    %238 = vmatprep.subr.bf16.mxu0 0
    %239 = vmatpush1.bf16.msra.mxu0 0
    %240 = vmatprep.mubr.bf16.mxu0 0
    %241 = vmatmul.mubr.bf16.gmra.mrb[0].mxu0 %v136
    %v242 = vpop.f32.mrb[0].mxu0
    %v243 = vadd.f32 %v158, %v242
    %v244 = vpop.f32.mrb[0].mxu0
    %v245 = vpop.f32.mrb[0].mxu0
    %v246 = vpop.f32.mrb[0].mxu0
    %247 = vdwg.mxu0
    %248 = vst [vmem:[%s4] sm:$0xff] %v243
  $region25: #{clip_forward.4} parent=0 // pred_fallthru
    _
  // Predicated region
  $region26: #{clip_forward.4} parent=0 // pred_check
    _
  $region27: #{clip_forward.4} parent=0 // pred_check_branch
    %250 = sbr.rel (0) target = $region29
  $region28: #{clip_forward.4} parent=0 // pred_region
    _
  $region29: #{clip_forward.4} parent=0 // pred_fallthru
    _
  // Predicated region
  $region30: #{clip_forward.4} parent=0 // pred_check
    _
  $region31: #{clip_forward.4} parent=0 // pred_check_branch
    %252 = sbr.rel (0) target = $region33
  $region32: #{clip_forward.4} parent=0 // pred_region
    _
  $region33: #{clip_forward.4} parent=0 // pred_fallthru
    _

// kernel: clip_forward.3
$region0: #{clip_forward.3}
  #allocation0 [shape = 'u32[]', space=smem, size = 0x4, offset = 0x4, fixed_abs, tag = 'smem constant byte address 0x4 - core index']
  #allocation1 [shape = 'u32[144,128]{1,0:T(1,128)}', space=vmem, size = 0x12000, scoped, tag = 'internal scratch']
  #allocation2 [shape = 'f32[8,128]{1,0:T(8,128)}', space=vmem, size = 0x1000, scoped, tag = 'scratch operand']
  %s0 = inlined_call_operand.vmem [shape: bf16[8,16,64], index: 0, kind: input, shape index: {}]
  %s1 = inlined_call_operand.vmem [shape: bf16[64,128], index: 1, kind: input, shape index: {}]
  %s2 = inlined_call_operand.vmem [shape: f32[1,128], index: 2, kind: input, shape index: {}]
  %s3 = inlined_call_operand.vmem [shape: bf16[128,128], index: 3, kind: input, shape index: {}]
  %s4 = inlined_call_operand.vmem [shape: f32[1,128], index: 4, kind: input, shape index: {}]
  %s5 = inlined_call_operand.vmem [shape: f32[8,128], index: 5, kind: output, shape index: {}]
  %s6 = sld [smem:[#allocation0]]
  $region38: #{clip_forward.3} parent=0
    _
  %s8 = ssub.s32 1, %s6
  %s9 = scalar_select 0, %s8, %s6
  // Predicated region
  $region2: #{clip_forward.3} parent=0 // pred_check
    _
  $region3: #{clip_forward.3} parent=0 // pred_check_branch
    %11 = sbr.rel (0) target = $region5
  $region4: #{clip_forward.3} parent=0 // pred_region
    _
  $region5: #{clip_forward.3} parent=0 // pred_fallthru
    _
  // Predicated region
  $region6: #{clip_forward.3} parent=0 // pred_check
    _
  $region7: #{clip_forward.3} parent=0 // pred_check_branch
    %13 = sbr.rel (0) target = $region9
  $region8: #{clip_forward.3} parent=0 // pred_region
    _
  $region9: #{clip_forward.3} parent=0 // pred_fallthru
    _
  // Predicated region
  $region10: #{clip_forward.3} parent=0 // pred_check
    _
  $region11: #{clip_forward.3} parent=0 // pred_check_branch
    %15 = sbr.rel (0) target = $region13
  $region12: #{clip_forward.3} parent=0 // pred_region
    _
  $region13: #{clip_forward.3} parent=0 // pred_fallthru
    _
  // Predicated region
  $region14: #{clip_forward.3} parent=0 // pred_check
    _
  $region15: #{clip_forward.3} parent=0 // pred_check_branch
    %17 = sbr.rel (0) target = $region17
  $region16: #{clip_forward.3} parent=0 // pred_region
    _
  $region17: #{clip_forward.3} parent=0 // pred_fallthru
    _
  // Predicated region
  $region18: #{clip_forward.3} parent=0 // pred_check
    _
  $region19: #{clip_forward.3} parent=0 // pred_check_branch
    %19 = sbr.rel (0) target = $region21
  $region20: #{clip_forward.3} parent=0 // pred_region
    _
  $region21: #{clip_forward.3} parent=0 // pred_fallthru
    _
  %p21 = scmp.eq.s32.totalorder 0, 0
  // Predicated region
  $region22: #{clip_forward.3} parent=0 // pred_check
    %p22 = pneg %p21
  $region23: #{clip_forward.3} parent=0 // pred_check_branch
    %24 = sbr.rel (%p22) target = $region25
  $region24: #{clip_forward.3} parent=0 // pred_region
    %25 = vst [vmem:[#allocation2] sm:$0xff] 0.0
  $region25: #{clip_forward.3} parent=0 // pred_fallthru
    _
  %v26 = vld [vmem:[%s0] sm:$0xf]
  %v27 = vld [vmem:[%s0 + $0x4] sm:$0xf]
  %v28 = vld [vmem:[%s0 + $0x8] sm:$0xf]
  %v29 = vld [vmem:[%s0 + $0xc] sm:$0xf]
  %v30 = vld [vmem:[%s0 + $0x10] sm:$0xf]
  %v31 = vld [vmem:[%s0 + $0x14] sm:$0xf]
  %v32 = vld [vmem:[%s0 + $0x18] sm:$0xf]
  %v33 = vld [vmem:[%s0 + $0x1c] sm:$0xf]
  %v34 = vld [vmem:[%s0 + $0x20] sm:$0xf]
  %v35 = vld [vmem:[%s0 + $0x24] sm:$0xf]
  %v36 = vld [vmem:[%s0 + $0x28] sm:$0xf]
  %v37 = vld [vmem:[%s0 + $0x2c] sm:$0xf]
  %v38 = vld [vmem:[%s0 + $0x30] sm:$0xf]
  %v39 = vld [vmem:[%s0 + $0x34] sm:$0xf]
  %v40 = vld [vmem:[%s0 + $0x38] sm:$0xf]
  %v41 = vld [vmem:[%s0 + $0x3c] sm:$0xf]
  %v42 = vld [vmem:[%s1] sm:$0xf]
  %v43 = vld [vmem:[%s1 + $0x4] sm:$0xf]
  %v44 = vld [vmem:[%s1 + $0x8] sm:$0xf]
  %v45 = vld [vmem:[%s1 + $0xc] sm:$0xf]
  %v46 = vld [vmem:[%s1 + $0x10] sm:$0xf]
  %v47 = vld [vmem:[%s1 + $0x14] sm:$0xf]
  %v48 = vld [vmem:[%s1 + $0x18] sm:$0xf]
  %v49 = vld [vmem:[%s1 + $0x1c] sm:$0xf]
  %v50 = vld [vmem:[%s2] sm:$0x1]
  %v52 = vlaneseq
  %v53 = vshrl.u32 %v52, 7
  %v54 = vsub.s32 0, %v53
  %v55 = vrot.slane %v50, %v54
  %v73 = vunpack.c.l.b16 %v26
  %v74 = vunpack.c.l.b16 %v27
  %v75 = vunpack.c.l.b16 %v28
  %v76 = vunpack.c.l.b16 %v29
  %v77 = vunpack.c.l.b16 %v30
  %v78 = vunpack.c.l.b16 %v31
  %v79 = vunpack.c.l.b16 %v32
  %v80 = vunpack.c.l.b16 %v33
  %v81 = vunpack.c.l.b16 %v34
  %v82 = vunpack.c.l.b16 %v35
  %v83 = vunpack.c.l.b16 %v36
  %v84 = vunpack.c.l.b16 %v37
  %v85 = vunpack.c.l.b16 %v38
  %v86 = vunpack.c.l.b16 %v39
  %v87 = vunpack.c.l.b16 %v40
  %v88 = vunpack.c.l.b16 %v41
  %v89 = vpack.c.b16 %v74, %v73
  %v90 = vpack.c.b16 %v76, %v75
  %v91 = vpack.c.b16 %v78, %v77
  %v92 = vpack.c.b16 %v80, %v79
  %v93 = vpack.c.b16 %v82, %v81
  %v94 = vpack.c.b16 %v84, %v83
  %v95 = vpack.c.b16 %v86, %v85
  %v96 = vpack.c.b16 %v88, %v87
  %v105 = vunpack.c.l.b16 %v42
  %v106 = vunpack.c.l.b16 %v43
  %v107 = vunpack.c.l.b16 %v44
  %v108 = vunpack.c.l.b16 %v45
  %v109 = vunpack.c.l.b16 %v46
  %v110 = vunpack.c.l.b16 %v47
  %v111 = vunpack.c.l.b16 %v48
  %v112 = vunpack.c.l.b16 %v49
  %v113 = vpack.c.b16 %v106, %v105
  %v114 = vpack.c.b16 %v108, %v107
  %v115 = vpack.c.b16 %v110, %v109
  %v116 = vpack.c.b16 %v112, %v111
  %vm121 = vcmask 523264
  %v123 = vsel %vm121, %v89, 0
  %v126 = vsel %vm121, %v90, 0
  %v129 = vsel %vm121, %v91, 0
  %v132 = vsel %vm121, %v92, 0
  %v135 = vsel %vm121, %v93, 0
  %v138 = vsel %vm121, %v94, 0
  %v141 = vsel %vm121, %v95, 0
  %v144 = vsel %vm121, %v96, 0
  %146 = vmatprep.subr.bf16.mxu0 0
  %147 = vmatpush1.bf16.msra.mxu0 %v113
  %148 = vmatprep.subr.bf16.mxu0 0
  %149 = vmatpush1.bf16.msra.mxu0 %v114
  %150 = vmatprep.subr.bf16.mxu0 0
  %151 = vmatpush1.bf16.msra.mxu0 %v115
  %152 = vmatprep.subr.bf16.mxu0 0
  %153 = vmatpush1.bf16.msra.mxu0 %v116
  %154 = vmatprep.subr.bf16.mxu0 0
  %155 = vmatpush1.bf16.msra.mxu0 0
  %156 = vmatprep.subr.bf16.mxu0 0
  %157 = vmatpush1.bf16.msra.mxu0 0
  %158 = vmatprep.subr.bf16.mxu0 0
  %159 = vmatpush1.bf16.msra.mxu0 0
  %160 = vmatprep.subr.bf16.mxu0 0
  %161 = vmatpush1.bf16.msra.mxu0 0
  %162 = vmatprep.subr.bf16.mxu0 0
  %163 = vmatpush1.bf16.msra.mxu0 0
  %164 = vmatprep.subr.bf16.mxu0 0
  %165 = vmatpush1.bf16.msra.mxu0 0
  %166 = vmatprep.subr.bf16.mxu0 0
  %167 = vmatpush1.bf16.msra.mxu0 0
  %168 = vmatprep.subr.bf16.mxu0 0
  %169 = vmatpush1.bf16.msra.mxu0 0
  %170 = vmatprep.subr.bf16.mxu0 0
  %171 = vmatpush1.bf16.msra.mxu0 0
  %172 = vmatprep.subr.bf16.mxu0 0
  %173 = vmatpush1.bf16.msra.mxu0 0
  %174 = vmatprep.subr.bf16.mxu0 0
  %175 = vmatpush1.bf16.msra.mxu0 0
  %176 = vmatprep.subr.bf16.mxu0 0
  %177 = vmatpush1.bf16.msra.mxu0 0
  %178 = vmatprep.mubr.bf16.mxu0 0
  %179 = vmatmul.mubr.bf16.gmra.mrb[0].mxu0 %v123
  %v180 = vpop.f32.mrb[0].mxu0
  %v181 = vadd.f32 %v55, %v180
  %v182 = vpop.f32.mrb[0].mxu0
  %v183 = vpop.f32.mrb[0].mxu0
  %v184 = vadd.f32 %v55, %v183
  %v185 = vpop.f32.mrb[0].mxu0
  %186 = vmatprep.mubr.bf16.mxu0 0
  %187 = vmatmul.mubr.bf16.gmra.mrb[0].mxu0 %v126
  %v188 = vpop.f32.mrb[0].mxu0
  %v189 = vadd.f32 %v55, %v188
  %v190 = vpop.f32.mrb[0].mxu0
  %v191 = vpop.f32.mrb[0].mxu0
  %v192 = vadd.f32 %v55, %v191
  %v193 = vpop.f32.mrb[0].mxu0
  %194 = vmatprep.mubr.bf16.mxu0 0
  %195 = vmatmul.mubr.bf16.gmra.mrb[0].mxu0 %v129
  %v196 = vpop.f32.mrb[0].mxu0
  %v197 = vadd.f32 %v55, %v196
  %v198 = vpop.f32.mrb[0].mxu0
  %v199 = vpop.f32.mrb[0].mxu0
  %v200 = vadd.f32 %v55, %v199
  %v201 = vpop.f32.mrb[0].mxu0
  %202 = vmatprep.mubr.bf16.mxu0 0
  %203 = vmatmul.mubr.bf16.gmra.mrb[0].mxu0 %v132
  %v204 = vpop.f32.mrb[0].mxu0
  %v205 = vadd.f32 %v55, %v204
  %v206 = vpop.f32.mrb[0].mxu0
  %v207 = vpop.f32.mrb[0].mxu0
  %v208 = vadd.f32 %v55, %v207
  %v209 = vpop.f32.mrb[0].mxu0
  %210 = vmatprep.mubr.bf16.mxu0 0
  %211 = vmatmul.mubr.bf16.gmra.mrb[0].mxu0 %v135
  %v212 = vpop.f32.mrb[0].mxu0
  %v213 = vadd.f32 %v55, %v212
  %v214 = vpop.f32.mrb[0].mxu0
  %v215 = vpop.f32.mrb[0].mxu0
  %v216 = vadd.f32 %v55, %v215
  %v217 = vpop.f32.mrb[0].mxu0
  %218 = vmatprep.mubr.bf16.mxu0 0
  %219 = vmatmul.mubr.bf16.gmra.mrb[0].mxu0 %v138
  %v220 = vpop.f32.mrb[0].mxu0
  %v221 = vadd.f32 %v55, %v220
  %v222 = vpop.f32.mrb[0].mxu0
  %v223 = vpop.f32.mrb[0].mxu0
  %v224 = vadd.f32 %v55, %v223
  %v225 = vpop.f32.mrb[0].mxu0
  %226 = vmatprep.mubr.bf16.mxu0 0
  %227 = vmatmul.mubr.bf16.gmra.mrb[0].mxu0 %v141
  %v228 = vpop.f32.mrb[0].mxu0
  %v229 = vadd.f32 %v55, %v228
  %v230 = vpop.f32.mrb[0].mxu0
  %v231 = vpop.f32.mrb[0].mxu0
  %v232 = vadd.f32 %v55, %v231
  %v233 = vpop.f32.mrb[0].mxu0
  %234 = vmatprep.mubr.bf16.mxu0 0
  %235 = vmatmul.mubr.bf16.gmra.mrb[0].mxu0 %v144
  %v236 = vpop.f32.mrb[0].mxu0
  %v237 = vadd.f32 %v55, %v236
  %v238 = vpop.f32.mrb[0].mxu0
  %v239 = vpop.f32.mrb[0].mxu0
  %v240 = vadd.f32 %v55, %v239
  %v241 = vpop.f32.mrb[0].mxu0
  %242 = vdwg.mxu0
  %v243 = vmax.f32 %v181, 0.0
  %v244 = vmax.f32 %v184, 0.0
  %v245 = vmax.f32 %v189, 0.0
  %v246 = vmax.f32 %v192, 0.0
  %v247 = vmax.f32 %v197, 0.0
  %v248 = vmax.f32 %v200, 0.0
  %v249 = vmax.f32 %v205, 0.0
  %v250 = vmax.f32 %v208, 0.0
  %v251 = vmax.f32 %v213, 0.0
  %v252 = vmax.f32 %v216, 0.0
  %v253 = vmax.f32 %v221, 0.0
  %v254 = vmax.f32 %v224, 0.0
  %v255 = vmax.f32 %v229, 0.0
  %v256 = vmax.f32 %v232, 0.0
  %v257 = vmax.f32 %v237, 0.0
  %v258 = vmax.f32 %v240, 0.0
  %v259 = vld [vmem:[#allocation2] sm:$0xff]
  %v260 = vadd.f32 %v243, %v244
  %v261 = vrot.slane %v260, 4
  %v262 = vadd.f32 %v260, %v261
  %v263 = vrot.slane %v262, 2
  %v264 = vadd.f32 %v262, %v263
  %v265 = vrot.slane %v264, 1
  %v266 = vadd.f32 %v264, %v265
  %v267 = vadd.f32 %v245, %v246
  %v268 = vrot.slane %v267, 4
  %v269 = vadd.f32 %v267, %v268
  %v270 = vrot.slane %v269, 2
  %v271 = vadd.f32 %v269, %v270
  %v272 = vrot.slane %v271, 1
  %v273 = vadd.f32 %v271, %v272
  %v274 = vadd.f32 %v247, %v248
  %v275 = vrot.slane %v274, 4
  %v276 = vadd.f32 %v274, %v275
  %v277 = vrot.slane %v276, 2
  %v278 = vadd.f32 %v276, %v277
  %v279 = vrot.slane %v278, 1
  %v280 = vadd.f32 %v278, %v279
  %v281 = vadd.f32 %v249, %v250
  %v282 = vrot.slane %v281, 4
  %v283 = vadd.f32 %v281, %v282
  %v284 = vrot.slane %v283, 2
  %v285 = vadd.f32 %v283, %v284
  %v286 = vrot.slane %v285, 1
  %v287 = vadd.f32 %v285, %v286
  %v288 = vadd.f32 %v251, %v252
  %v289 = vrot.slane %v288, 4
  %v290 = vadd.f32 %v288, %v289
  %v291 = vrot.slane %v290, 2
  %v292 = vadd.f32 %v290, %v291
  %v293 = vrot.slane %v292, 1
  %v294 = vadd.f32 %v292, %v293
  %v295 = vadd.f32 %v253, %v254
  %v296 = vrot.slane %v295, 4
  %v297 = vadd.f32 %v295, %v296
  %v298 = vrot.slane %v297, 2
  %v299 = vadd.f32 %v297, %v298
  %v300 = vrot.slane %v299, 1
  %v301 = vadd.f32 %v299, %v300
  %v302 = vadd.f32 %v255, %v256
  %v303 = vrot.slane %v302, 4
  %v304 = vadd.f32 %v302, %v303
  %v305 = vrot.slane %v304, 2
  %v306 = vadd.f32 %v304, %v305
  %v307 = vrot.slane %v306, 1
  %v308 = vadd.f32 %v306, %v307
  %v309 = vadd.f32 %v257, %v258
  %v310 = vrot.slane %v309, 4
  %v311 = vadd.f32 %v309, %v310
  %v312 = vrot.slane %v311, 2
  %v313 = vadd.f32 %v311, %v312
  %v314 = vrot.slane %v313, 1
  %v315 = vadd.f32 %v313, %v314
  %vm324 = vcmask 1041409
  %v325 = vsel %vm324, %v273, %v266
  %vm326 = vcmask 1042434
  %v327 = vsel %vm326, %v280, %v325
  %vm328 = vcmask 1043459
  %v329 = vsel %vm328, %v287, %v327
  %vm330 = vcmask 1044484
  %v331 = vsel %vm330, %v294, %v329
  %vm332 = vcmask 1045509
  %v333 = vsel %vm332, %v301, %v331
  %vm334 = vcmask 1046534
  %v335 = vsel %vm334, %v308, %v333
  %vm336 = vcmask 1047559
  %v337 = vsel %vm336, %v315, %v335
  %v339 = vadd.f32 %v259, %v337
  %340 = vst [vmem:[#allocation2] sm:$0xff] %v339
  // Predicated region
  $region26: #{clip_forward.3} parent=0 // pred_check
    %p341 = pneg %p21
  $region27: #{clip_forward.3} parent=0 // pred_check_branch
    %343 = sbr.rel (%p341) target = $region29
  $region28: #{clip_forward.3} parent=0 // pred_region
    %v344 = vld [vmem:[#allocation2] sm:$0xff]
    %v345 = vmul.f32 %v344, 0.0625
    %v346 = vpack.c.bf16 %v345, %v345
    %v347 = vld [vmem:[%s3] sm:$0xf]
    %v348 = vld [vmem:[%s3 + $0x4] sm:$0xf]
    %v349 = vld [vmem:[%s3 + $0x8] sm:$0xf]
    %v350 = vld [vmem:[%s3 + $0xc] sm:$0xf]
    %v351 = vld [vmem:[%s3 + $0x10] sm:$0xf]
    %v352 = vld [vmem:[%s3 + $0x14] sm:$0xf]
    %v353 = vld [vmem:[%s3 + $0x18] sm:$0xf]
    %v354 = vld [vmem:[%s3 + $0x1c] sm:$0xf]
    %v355 = vld [vmem:[%s3 + $0x20] sm:$0xf]
    %v356 = vld [vmem:[%s3 + $0x24] sm:$0xf]
    %v357 = vld [vmem:[%s3 + $0x28] sm:$0xf]
    %v358 = vld [vmem:[%s3 + $0x2c] sm:$0xf]
    %v359 = vld [vmem:[%s3 + $0x30] sm:$0xf]
    %v360 = vld [vmem:[%s3 + $0x34] sm:$0xf]
    %v361 = vld [vmem:[%s3 + $0x38] sm:$0xf]
    %v362 = vld [vmem:[%s3 + $0x3c] sm:$0xf]
    %v363 = vld [vmem:[%s4] sm:$0x1]
    %v365 = vlaneseq
    %v366 = vshrl.u32 %v365, 7
    %v367 = vsub.s32 0, %v366
    %v368 = vrot.slane %v363, %v367
    %v386 = vunpack.c.l.b16 %v347
    %v387 = vunpack.c.l.b16 %v348
    %v388 = vunpack.c.l.b16 %v349
    %v389 = vunpack.c.l.b16 %v350
    %v390 = vunpack.c.l.b16 %v351
    %v391 = vunpack.c.l.b16 %v352
    %v392 = vunpack.c.l.b16 %v353
    %v393 = vunpack.c.l.b16 %v354
    %v394 = vunpack.c.l.b16 %v355
    %v395 = vunpack.c.l.b16 %v356
    %v396 = vunpack.c.l.b16 %v357
    %v397 = vunpack.c.l.b16 %v358
    %v398 = vunpack.c.l.b16 %v359
    %v399 = vunpack.c.l.b16 %v360
    %v400 = vunpack.c.l.b16 %v361
    %v401 = vunpack.c.l.b16 %v362
    %v402 = vpack.c.b16 %v387, %v386
    %v403 = vpack.c.b16 %v389, %v388
    %v404 = vpack.c.b16 %v391, %v390
    %v405 = vpack.c.b16 %v393, %v392
    %v406 = vpack.c.b16 %v395, %v394
    %v407 = vpack.c.b16 %v397, %v396
    %v408 = vpack.c.b16 %v399, %v398
    %v409 = vpack.c.b16 %v401, %v400
    %418 = vmatprep.subr.bf16.mxu0 0
    %419 = vmatpush1.bf16.msra.mxu0 %v402
    %420 = vmatprep.subr.bf16.mxu0 0
    %421 = vmatpush1.bf16.msra.mxu0 %v403
    %422 = vmatprep.subr.bf16.mxu0 0
    %423 = vmatpush1.bf16.msra.mxu0 %v404
    %424 = vmatprep.subr.bf16.mxu0 0
    %425 = vmatpush1.bf16.msra.mxu0 %v405
    %426 = vmatprep.subr.bf16.mxu0 0
    %427 = vmatpush1.bf16.msra.mxu0 %v406
    %428 = vmatprep.subr.bf16.mxu0 0
    %429 = vmatpush1.bf16.msra.mxu0 %v407
    %430 = vmatprep.subr.bf16.mxu0 0
    %431 = vmatpush1.bf16.msra.mxu0 %v408
    %432 = vmatprep.subr.bf16.mxu0 0
    %433 = vmatpush1.bf16.msra.mxu0 %v409
    %434 = vmatprep.subr.bf16.mxu0 0
    %435 = vmatpush1.bf16.msra.mxu0 0
    %436 = vmatprep.subr.bf16.mxu0 0
    %437 = vmatpush1.bf16.msra.mxu0 0
    %438 = vmatprep.subr.bf16.mxu0 0
    %439 = vmatpush1.bf16.msra.mxu0 0
    %440 = vmatprep.subr.bf16.mxu0 0
    %441 = vmatpush1.bf16.msra.mxu0 0
    %442 = vmatprep.subr.bf16.mxu0 0
    %443 = vmatpush1.bf16.msra.mxu0 0
    %444 = vmatprep.subr.bf16.mxu0 0
    %445 = vmatpush1.bf16.msra.mxu0 0
    %446 = vmatprep.subr.bf16.mxu0 0
    %447 = vmatpush1.bf16.msra.mxu0 0
    %448 = vmatprep.subr.bf16.mxu0 0
    %449 = vmatpush1.bf16.msra.mxu0 0
    %450 = vmatprep.mubr.bf16.mxu0 0
    %451 = vmatmul.mubr.bf16.gmra.mrb[0].mxu0 %v346
    %v452 = vpop.f32.mrb[0].mxu0
    %v453 = vadd.f32 %v368, %v452
    %v454 = vpop.f32.mrb[0].mxu0
    %v455 = vpop.f32.mrb[0].mxu0
    %v456 = vpop.f32.mrb[0].mxu0
    %457 = vdwg.mxu0
    %458 = vst [vmem:[%s5] sm:$0xff] %v453
  $region29: #{clip_forward.3} parent=0 // pred_fallthru
    _
  // Predicated region
  $region30: #{clip_forward.3} parent=0 // pred_check
    _
  $region31: #{clip_forward.3} parent=0 // pred_check_branch
    %460 = sbr.rel (0) target = $region33
  $region32: #{clip_forward.3} parent=0 // pred_region
    _
  $region33: #{clip_forward.3} parent=0 // pred_fallthru
    _
  // Predicated region
  $region34: #{clip_forward.3} parent=0 // pred_check
    _
  $region35: #{clip_forward.3} parent=0 // pred_check_branch
    %462 = sbr.rel (0) target = $region37
  $region36: #{clip_forward.3} parent=0 // pred_region
    _
  $region37: #{clip_forward.3} parent=0 // pred_fallthru
    _

</llo_original>
